<compile_context>
chip_gen: v6e
topology: v6e:2x2x1
jax: 0.10.0
libtpu: 0.0.40
codegen_flags: <defaults>
</compile_context>

<pallas_src>
import jax
import jax.numpy as jnp
from jax.experimental import pallas as pl
from jax.experimental.pallas import tpu as pltpu


_LANE = 128                       # lane width
_MAX_COLS = 2048                  # lane-dense output width (multiple of 128)
_TILE_BYTES = 2 * 1024 * 1024     # per-buffer tile budget; in+out double-buffered -> ~8 MiB VMEM


def _cdiv(a: int, b: int) -> int:
    return (a + b - 1) // b


def _make_swiglu_kernel(s: float):
    s = float(s)  # baked in at trace time — no SMEM operand needed

    def kernel(x_ref, o_ref):
        x = x_ref[...].astype(jnp.float32)
        o_ref[...] = (x * jax.nn.sigmoid(x * s)).astype(o_ref.dtype)

    return kernel


def swiglu(x: jax.Array, s: float) -> jax.Array:
    """y = x * sigmoid(x * s), elementwise, via a Pallas TPU kernel."""
    orig_shape = x.shape
    orig_dtype = x.dtype
    total = x.size
    itemsize = jnp.dtype(orig_dtype).itemsize

    # ---- Flatten to a lane-dense 2-D slab [rows, cols], cols % 128 == 0. ----
    padded_len = _cdiv(total, _LANE) * _LANE
    cols = min(_MAX_COLS, padded_len)          # multiple of 128 either way
    rows = _cdiv(total, cols)

    # ---- Row-tile size: stream ~2 MiB per buffer (256 rows f32 / 512 bf16). --
    blk_m = max(8, (_TILE_BYTES // (cols * itemsize)) // 8 * 8)
    if blk_m >= rows:
        blk_m = rows                           # single full-extent block is legal
        rows_padded = rows
    else:
        rows_padded = _cdiv(rows, blk_m) * blk_m  # keep rows divisible by blk_m

    # v7x megacore: prefer >= 2 parallel grid steps when alignment allows.
    if rows_padded // blk_m == 1 and blk_m % 16 == 0:
        blk_m //= 2

    grid = (rows_padded // blk_m,)

    # ---- Zero-pad the tail (swiglu(0) == 0, so padding is inert). ------------
    xf = x.reshape(-1)
    pad = rows_padded * cols - total
    if pad:
        xf = jnp.pad(xf, (0, pad))
    x2 = xf.reshape(rows_padded, cols)

    out2 = pl.pallas_call(
        _make_swiglu_kernel(s),
        out_shape=jax.ShapeDtypeStruct((rows_padded, cols), orig_dtype),
        grid=grid,
        in_specs=[pl.BlockSpec((blk_m, cols), lambda i: (i, 0))],
        out_specs=pl.BlockSpec((blk_m, cols), lambda i: (i, 0)),
        compiler_params=pltpu.CompilerParams(
            dimension_semantics=("parallel",),
            vmem_limit_bytes=32 * 1024 * 1024,  # well above the ~8 MiB we use
        ),
    )(x2)

    out_flat = out2.reshape(-1)
    if pad:
        out_flat = out_flat[:total]
    return out_flat.reshape(orig_shape)


def swiglu_ref(x: jax.Array, s: float) -> jax.Array:
    return x * jax.nn.sigmoid(x * s)


if __name__ == "__main__":
    key = jax.random.PRNGKey(0)
    # NCHW activation: batch=2, channels=4, 16x16 spatial.
    x = jax.random.normal(key, (2, 4, 16, 16), dtype=jnp.float32)
    s = 1.702  # deterministic scale of the Swiglu module

    y = swiglu(x, s)
    jax.block_until_ready(y)

    y_ref = swiglu_ref(x, s)
    assert y.shape == x.shape and y.dtype == x.dtype
    assert jnp.allclose(y, y_ref, atol=1e-5, rtol=1e-5)

    print("KERNEL_OK")
</pallas_src>

<mosaic_0001>
module attributes {stable_mosaic.version = 11 : i64} {
  func.func @kernel(%arg0: i32, %arg1: memref<1x2048xf32, #tpu.memory_space<vmem>>, %arg2: memref<1x2048xf32, #tpu.memory_space<vmem>>) attributes {dimension_semantics = [#tpu.dimension_semantics<parallel>], iteration_bounds = array<i64: 1>, scalar_prefetch = 0 : i64, scratch_operands = 0 : i64, tpu.core_type = #tpu.core_type<tc>, window_params = [{transform_indices = @transform_0, window_bounds = array<i64: 1, 2048>}, {transform_indices = @transform_1, window_bounds = array<i64: 1, 2048>}]} {
    %c0 = arith.constant 0 : index
    %c0_0 = arith.constant 0 : index
    %0 = vector.load %arg1[%c0, %c0_0] : memref<1x2048xf32, #tpu.memory_space<vmem>>, vector<1x2048xf32>
    %cst = arith.constant 1.702000e+00 : f32
    %1 = vector.broadcast %cst : f32 to vector<1x2048xf32>
    %2 = arith.mulf %0, %1 : vector<1x2048xf32>
    %3 = arith.negf %2 : vector<1x2048xf32>
    %4 = math.exp %3 : vector<1x2048xf32>
    %cst_1 = arith.constant 1.000000e+00 : f32
    %5 = vector.broadcast %cst_1 : f32 to vector<1x2048xf32>
    %6 = arith.addf %5, %4 : vector<1x2048xf32>
    %7 = arith.divf %5, %6 : vector<1x2048xf32>
    %8 = arith.mulf %0, %7 : vector<1x2048xf32>
    %c0_2 = arith.constant 0 : index
    %c0_3 = arith.constant 0 : index
    %9 = vector.load %arg2[%c0_2, %c0_3] : memref<1x2048xf32, #tpu.memory_space<vmem>>, vector<1x2048xf32>
    tpu.vector_store %arg2[%c0_2, %c0_3], %8 {strides = array<i32>} : memref<1x2048xf32, #tpu.memory_space<vmem>>, vector<1x2048xf32>,
    return
  }
  func.func @transform_0(%arg0: i32) -> (i32, i32) {
    %c0_i32 = arith.constant 0 : i32
    %c0_i32_0 = arith.constant 0 : i32
    return %arg0, %c0_i32 : i32, i32
  }
  func.func @transform_1(%arg0: i32) -> (i32, i32) {
    %c0_i32 = arith.constant 0 : i32
    %c0_i32_0 = arith.constant 0 : i32
    return %arg0, %c0_i32 : i32, i32
  }
}

</mosaic_0001>

<llo_original>
// kernel: tpu_custom_call.1
$region0: #{tpu_custom_call.1}
  #allocation0 [shape = 'u32[]', space=smem, size = 0x4, offset = 0x4, fixed_abs, tag = 'smem constant byte address 0x4 - core index']
  #allocation1 [shape = 'u32[144,128]{1,0:T(1,128)}', space=vmem, size = 0x12000, scoped, tag = 'internal scratch']
  %s0 = inlined_call_operand.hbm [shape: f32[1,2048], index: 0, kind: input, shape index: {}]
  %s1 = inlined_call_operand.hbm [shape: f32[1,2048], index: 1, kind: output, shape index: {}]
  %s2 = sld [smem:[#allocation0]]
  $region18: #{tpu_custom_call.1} parent=0
    _
  %s4 = ssub.s32 1, %s2
  %s5 = scalar_select 0, %s4, %s2
  $region1: #{tpu_custom_call.1} parent=0
    #allocation2 [shape = 'u8[8192]{0}', space=vmem, size = 0x2000, scoped, tag = 'input window, operand 0, single buffered']
    #allocation3 [shape = 's32[1]{0}', space=sflag, size = 0x4, scoped, tag = 'scoped memory for tpu_custom_call.1']
    #allocation4 [shape = 's32[1]{0}', space=sflag, size = 0x4, scoped, tag = 'scoped memory for tpu_custom_call.1']
    #allocation5 [shape = 'u8[8192]{0}', space=vmem, size = 0x2000, scoped, tag = 'output window, operand 0, single buffered']
    %6 = vsyncpa [#allocation3], 0
    %7 = vsyncpa [#allocation4], 0
    // Predicated region
    $region2: #{tpu_custom_call.1} parent=1 // pred_check
      _
    $region3: #{tpu_custom_call.1} parent=1 // pred_check_branch
      %9 = sbr.rel (0) target = $region5
    $region4: #{tpu_custom_call.1} parent=1 // pred_region
      %s11 = ssub.s32 256, 256
      %12 = vsyncadd [#allocation3], %s11
      %s14 = sshll.u32 [#allocation2], 4
      %s15 = int_to_ptr.vmem [resolvable:$true] %s14
      %17 = dma.hbm_to_vmem [thread:$0]  %s0, 256, %s15, [#allocation3]
    $region5: #{tpu_custom_call.1} parent=1 // pred_fallthru
      _
    // Predicated region
    $region6: #{tpu_custom_call.1} parent=1 // pred_check
      _
    $region7: #{tpu_custom_call.1} parent=1 // pred_check_branch
      %19 = sbr.rel (0) target = $region9
    $region8: #{tpu_custom_call.1} parent=1 // pred_region
      %20 = dma.done [#allocation3], 256
    $region9: #{tpu_custom_call.1} parent=1 // pred_fallthru
      _
    %v21 = vld [vmem:[#allocation2] sm:$0xff]
    %v22 = vld [vmem:[#allocation2 + $0x8] sm:$0xff]
    %v23 = vmul.f32 %v21, 1.702
    %v24 = vmul.f32 %v22, 1.702
    %v25 = vxor.u32 %v23, 2147483648
    %v26 = vxor.u32 %v24, 2147483648
    %v27 = vmul.f32 %v25, 1.442695
    %v28 = vpow.pop %v27
    %v29 = vmul.f32 %v26, 1.442695
    %v30 = vpow.pop %v29
    %v31 = vadd.f32 %v28, 1.0
    %v32 = vadd.f32 %v30, 1.0
    %v33 = vrcp.pop %v31
    %v34 = vmul.f32 1.0, %v33
    %v35 = vrcp.pop %v32
    %v36 = vmul.f32 1.0, %v35
    %v37 = vmul.f32 %v21, %v34
    %v38 = vmul.f32 %v22, %v36
    %39 = vst [vmem:[#allocation5] sm:$0xff] %v37
    %40 = vst [vmem:[#allocation5 + $0x8] sm:$0xff] %v38
    // Predicated region
    $region10: #{tpu_custom_call.1} parent=1 // pred_check
      _
    $region11: #{tpu_custom_call.1} parent=1 // pred_check_branch
      %42 = sbr.rel (0) target = $region13
    $region12: #{tpu_custom_call.1} parent=1 // pred_region
      %s44 = ssub.s32 256, 256
      %45 = vsyncadd [#allocation4], %s44
      %s47 = sshll.u32 [#allocation5], 4
      %s48 = int_to_ptr.vmem [resolvable:$true] %s47
      %50 = dma.vmem_to_hbm [thread:$0]  %s48, 256, %s1, [#allocation4]
    $region13: #{tpu_custom_call.1} parent=1 // pred_fallthru
      _
    // Predicated region
    $region14: #{tpu_custom_call.1} parent=1 // pred_check
      _
    $region15: #{tpu_custom_call.1} parent=1 // pred_check_branch
      %52 = sbr.rel (0) target = $region17
    $region16: #{tpu_custom_call.1} parent=1 // pred_region
      %53 = dma.done [#allocation4], 256
    $region17: #{tpu_custom_call.1} parent=1 // pred_fallthru
      _
    %54 = vsyncpa [#allocation3], 1
    %55 = vsyncpa [#allocation4], 1

</llo_original>
